<compile_context>
chip_gen: v7x
topology: tpu7x:2x2x1
jax: 0.10.0
libtpu: 0.0.40
codegen_flags: <defaults>
</compile_context>

<pallas_src>
import functools

import jax
import jax.numpy as jnp
from jax.experimental import pallas as pl
from jax.experimental.pallas import tpu as pltpu


def _round_up(x, m):
    return ((x + m - 1) // m) * m


def _epilogue_dtype():
    """bf16 epilogue only on chips with bf16 VPU/EUP (v6e / v7x); f32 otherwise."""
    try:
        kind = jax.devices()[0].device_kind.lower()
    except Exception:
        return jnp.float32
    if ("v6" in kind) or ("v7" in kind) or ("7x" in kind):
        return jnp.bfloat16
    return jnp.float32


def decoder_kernel(z_ref, w1_ref, b1_ref, w2_ref, b2_ref, out_ref, *, ep_dtype):
    # z tile: [TB, z_dim] bf16; weights bf16 [in, out]; biases f32 [1, out].
    z = z_ref[...]
    # linear1 on the MXU (bf16 operands, f32 accumulate) + bias + ReLU.
    h = jnp.dot(z, w1_ref[...], preferred_element_type=jnp.float32)      # [TB, Hp]
    h = jnp.maximum(h + b1_ref[...], 0.0).astype(jnp.bfloat16)
    # linear2 + bias.
    y = jnp.dot(h, w2_ref[...], preferred_element_type=jnp.float32)      # [TB, I]
    y = (y + b2_ref[...]).astype(ep_dtype)
    # sigmoid(y) = 1 / (1 + exp(-y)); exp runs on the EUP (bf16 on v6e/v7x for
    # 2x packed throughput) and the approx reciprocal also lands on the EUP
    # slot instead of burning VALU cycles on an f32 divide.
    denom = (1.0 + jnp.exp(-y)).astype(jnp.float32)
    out_ref[...] = pl.reciprocal(denom, approx=True).astype(out_ref.dtype)


def prepare_decoder_params(w1, b1, w2, b2):
    """One-time weight preprocessing (hoisted out of the per-call path).

    w1: [hidden_dim, z_dim], b1: [hidden_dim]   (torch nn.Linear layout)
    w2: [image_size, hidden_dim], b2: [image_size]

    Returns pre-transposed ([in, out]) bf16 weights with the hidden dim
    zero-padded to a multiple of 128 (exact: padded hidden units have zero
    weights and zero bias, so ReLU(0)=0 contributes nothing to linear2),
    plus f32 biases reshaped to [1, out] rows.
    """
    hidden_dim, z_dim = w1.shape
    image_size = w2.shape[0]
    hp = _round_up(hidden_dim, 128)

    bf16, f32 = jnp.bfloat16, jnp.float32
    w1_t = jnp.zeros((z_dim, hp), bf16).at[:, :hidden_dim].set(w1.T.astype(bf16))
    b1_p = jnp.zeros((1, hp), f32).at[0, :hidden_dim].set(b1.astype(f32))
    w2_t = jnp.zeros((hp, image_size), bf16).at[:hidden_dim, :].set(w2.T.astype(bf16))
    b2_p = b2.astype(f32).reshape(1, image_size)
    return w1_t, b1_p, w2_t, b2_p


def _choose_batch_tile(B, z_dim, hp, image_size, out_bytes, resident_bytes, tb_max):
    """Batch tile selection: big enough to amortize the ~0.35 us per-step
    overhead, >=2 tiles when B allows (so v7x's 'parallel' axis feeds both
    TensorCores), multiples of 256 when large (full MXU rows on v6e/v7x), and
    capped so double-buffered tiles + resident weights stay well under the
    scoped-VMEM limit of every generation (v7x: 32 MiB default / 64 MiB phys)."""
    if B >= 16:
        tb = min(tb_max, _round_up(pl.cdiv(B, 2), 8))
    else:
        tb = _round_up(max(B, 1), 8)

    # Rough per-batch-row VMEM cost: double-buffered z (bf16) and out tiles,
    # plus f32/bf16 intermediates (h, y) inside the kernel.
    per_row = 2 * (2 * z_dim) + 2 * (out_bytes * image_size) + 8 * hp + 10 * image_size
    budget = 26 * 2**20
    avail = budget - resident_bytes
    tb_cap = max((avail // per_row) // 8 * 8, 8) if avail > 0 else 8
    tb = max(min(tb, tb_cap), 8)
    if tb >= 256:
        tb = (tb // 256) * 256
    return tb


def decoder_forward(z, params, *, out_dtype=jnp.float32, tb_max=1024):
    """VAE decoder forward: sigmoid(relu(z @ W1^T + b1) @ W2^T + b2).

    z        : [B, z_dim]
    params   : output of prepare_decoder_params (padded/transposed bf16 weights)
    out_dtype: float32 (default, matches the torch module) or bfloat16 to halve
               the dominant output-store HBM traffic.
    returns  : [B, image_size] out_dtype
    """
    w1_t, b1_p, w2_t, b2_p = params
    B, z_dim = z.shape
    hp = w1_t.shape[1]
    image_size = w2_t.shape[1]
    assert w1_t.shape[0] == z_dim and w2_t.shape[0] == hp

    out_bytes = jnp.dtype(out_dtype).itemsize
    # Weights/biases stay resident (constant index_map); count them double-
    # buffered to be conservative when budgeting the batch tile.
    resident_bytes = 2 * 2 * (w1_t.size + w2_t.size) + 2 * 4 * (b1_p.size + b2_p.size)
    # NOTE: for very large hidden/image sizes the fully-resident-weight
    # strategy can exceed v7x's scoped VMEM; at that point add a grid axis
    # tiling W2 over the image dim (marked "arbitrary") instead.
    tb = _choose_batch_tile(B, z_dim, hp, image_size, out_bytes, resident_bytes, tb_max)
    grid = (pl.cdiv(B, tb),)

    z_bf = z.astype(jnp.bfloat16)   # bf16 feed: half the z DMA, no in-kernel cast
    kernel = functools.partial(decoder_kernel, ep_dtype=_epilogue_dtype())

    return pl.pallas_call(
        kernel,
        out_shape=jax.ShapeDtypeStruct((B, image_size), out_dtype),
        grid_spec=pltpu.PrefetchScalarGridSpec(
            num_scalar_prefetch=0,
            grid=grid,
            in_specs=[
                # z tiled over batch; last dim equals the full array dim so no
                # 128-lane padding (and no wrapper pad pass) is needed.
                pl.BlockSpec((tb, z_dim), lambda i: (i, 0)),
                pl.BlockSpec((z_dim, hp), lambda i: (0, 0)),        # W1 resident
                pl.BlockSpec((1, hp), lambda i: (0, 0)),            # b1 resident
                pl.BlockSpec((hp, image_size), lambda i: (0, 0)),   # W2 resident
                pl.BlockSpec((1, image_size), lambda i: (0, 0)),    # b2 resident
            ],
            # Exact logical output width/batch: no pad + XLA-slice round trip;
            # Pallas masks the ragged lane tail and ragged final batch tile.
            out_specs=pl.BlockSpec((tb, image_size), lambda i: (i, 0)),
        ),
        compiler_params=pltpu.CompilerParams(
            dimension_semantics=("parallel",),   # batch tiles across TCs on v7x
            vmem_limit_bytes=48 * 2**20,         # above v5e's 16 MiB scoped default
        ),
    )(z_bf, w1_t, b1_p, w2_t, b2_p)


def reference_forward(z, w1, b1, w2, b2):
    h = jnp.maximum(z @ w1.T + b1, 0.0)
    return jax.nn.sigmoid(h @ w2.T + b2)


if __name__ == "__main__":
    # Small, module-consistent shapes; ragged feature dims exercise the exact-
    # width (masked-tail) store path, and B=48 gives a 2-step batch grid so the
    # "parallel" batch axis is non-trivial.
    B, z_dim, hidden_dim, image_size = 48, 20, 40, 200

    key = jax.random.PRNGKey(0)
    kz, kw1, kb1, kw2, kb2 = jax.random.split(key, 5)

    # Deterministic init mimicking nn.Linear's uniform(-1/sqrt(in), 1/sqrt(in)).
    def linear_init(kw, kb, in_f, out_f):
        bound = 1.0 / jnp.sqrt(jnp.float32(in_f))
        w = jax.random.uniform(kw, (out_f, in_f), jnp.float32, -bound, bound)
        b = jax.random.uniform(kb, (out_f,), jnp.float32, -bound, bound)
        return w, b

    w1, b1 = linear_init(kw1, kb1, z_dim, hidden_dim)
    w2, b2 = linear_init(kw2, kb2, hidden_dim, image_size)
    z = jax.random.normal(kz, (B, z_dim), jnp.float32)

    params = prepare_decoder_params(w1, b1, w2, b2)   # one-time, hoisted
    out = decoder_forward(z, params)
    out = jax.block_until_ready(out)

    ref = reference_forward(z, w1, b1, w2, b2)
    assert out.shape == (B, image_size)
    assert out.dtype == jnp.float32
    # bf16 MXU operands / epilogue + approx reciprocal -> loosened tolerance
    # (outputs are sigmoid in (0,1)).
    assert jnp.allclose(out, ref, atol=2e-2, rtol=2e-2), "mismatch vs reference"

    print("KERNEL_OK")
</pallas_src>

<mosaic_0001>
module attributes {stable_mosaic.version = 11 : i64} {
  func.func @decoder_kernel(%arg0: i32, %arg1: memref<24x20xbf16, #tpu.memory_space<vmem>>, %arg2: memref<20x128xbf16, #tpu.memory_space<vmem>>, %arg3: memref<1x128xf32, #tpu.memory_space<vmem>>, %arg4: memref<128x200xbf16, #tpu.memory_space<vmem>>, %arg5: memref<1x200xf32, #tpu.memory_space<vmem>>, %arg6: memref<24x200xf32, #tpu.memory_space<vmem>>) attributes {dimension_semantics = [#tpu.dimension_semantics<parallel>], iteration_bounds = array<i64: 2>, scalar_prefetch = 0 : i64, scratch_operands = 0 : i64, tpu.core_type = #tpu.core_type<tc>, window_params = [{transform_indices = @transform_0, window_bounds = array<i64: 24, 20>}, {pipeline_mode = #tpu.pipeline_mode<synchronous>, transform_indices = @transform_1, window_bounds = array<i64: 20, 128>}, {pipeline_mode = #tpu.pipeline_mode<synchronous>, transform_indices = @transform_2, window_bounds = array<i64: 1, 128>}, {pipeline_mode = #tpu.pipeline_mode<synchronous>, transform_indices = @transform_3, window_bounds = array<i64: 128, 200>}, {pipeline_mode = #tpu.pipeline_mode<synchronous>, transform_indices = @transform_4, window_bounds = array<i64: 1, 200>}, {transform_indices = @transform_5, window_bounds = array<i64: 24, 200>}]} {
    %c0 = arith.constant 0 : index
    %c0_0 = arith.constant 0 : index
    %0 = vector.load %arg1[%c0, %c0_0] : memref<24x20xbf16, #tpu.memory_space<vmem>>, vector<24x20xbf16>
    %c0_1 = arith.constant 0 : index
    %c0_2 = arith.constant 0 : index
    %1 = vector.load %arg2[%c0_1, %c0_2] : memref<20x128xbf16, #tpu.memory_space<vmem>>, vector<20x128xbf16>
    %cst = arith.constant dense<0.000000e+00> : vector<24x128xf32>
    %2 = tpu.matmul %0, %1, %cst {dimension_numbers = #tpu.dot_dimension_numbers<[1], [0], [0], [1], [0, 0, 1, 1], [], []>} : vector<24x20xbf16>, vector<20x128xbf16>, vector<24x128xf32> -> vector<24x128xf32>
    %c0_3 = arith.constant 0 : index
    %c0_4 = arith.constant 0 : index
    %3 = vector.load %arg3[%c0_3, %c0_4] : memref<1x128xf32, #tpu.memory_space<vmem>>, vector<1x128xf32>
    %4 = vector.broadcast %3 : vector<1x128xf32> to vector<24x128xf32>
    %5 = arith.addf %2, %4 : vector<24x128xf32>
    %cst_5 = arith.constant 0.000000e+00 : f32
    %6 = vector.broadcast %cst_5 : f32 to vector<24x128xf32>
    %7 = arith.maximumf %5, %6 : vector<24x128xf32>
    %8 = arith.truncf %7 : vector<24x128xf32> to vector<24x128xbf16>
    %c0_6 = arith.constant 0 : index
    %c0_7 = arith.constant 0 : index
    %9 = vector.load %arg4[%c0_6, %c0_7] : memref<128x200xbf16, #tpu.memory_space<vmem>>, vector<128x200xbf16>
    %cst_8 = arith.constant dense<0.000000e+00> : vector<24x200xf32>
    %10 = tpu.matmul %8, %9, %cst_8 {dimension_numbers = #tpu.dot_dimension_numbers<[1], [0], [0], [1], [0, 0, 1, 1], [], []>} : vector<24x128xbf16>, vector<128x200xbf16>, vector<24x200xf32> -> vector<24x200xf32>
    %c0_9 = arith.constant 0 : index
    %c0_10 = arith.constant 0 : index
    %11 = vector.load %arg5[%c0_9, %c0_10] : memref<1x200xf32, #tpu.memory_space<vmem>>, vector<1x200xf32>
    %12 = vector.broadcast %11 : vector<1x200xf32> to vector<24x200xf32>
    %13 = arith.addf %10, %12 : vector<24x200xf32>
    %cst_11 = arith.constant 0.000000e+00 : f32
    %14 = vector.broadcast %cst_11 : f32 to vector<24x200xf32>
    %15 = arith.subf %14, %13 : vector<24x200xf32>
    %16 = math.exp %15 : vector<24x200xf32>
    %cst_12 = arith.constant 1.000000e+00 : f32
    %17 = vector.broadcast %cst_12 : f32 to vector<24x200xf32>
    %18 = arith.addf %17, %16 : vector<24x200xf32>
    %19 = tpu.reciprocal %18 {approx = true} : vector<24x200xf32> -> vector<24x200xf32>
    %c0_13 = arith.constant 0 : index
    %c0_14 = arith.constant 0 : index
    %20 = vector.load %arg6[%c0_13, %c0_14] : memref<24x200xf32, #tpu.memory_space<vmem>>, vector<24x200xf32>
    tpu.vector_store %arg6[%c0_13, %c0_14], %19 {strides = array<i32>} : memref<24x200xf32, #tpu.memory_space<vmem>>, vector<24x200xf32>,
    return
  }
  func.func @transform_0(%arg0: i32) -> (i32, i32) {
    %c0_i32 = arith.constant 0 : i32
    %c0_i32_0 = arith.constant 0 : i32
    return %arg0, %c0_i32 : i32, i32
  }
  func.func @transform_1(%arg0: i32) -> (i32, i32) {
    %c0_i32 = arith.constant 0 : i32
    %c0_i32_0 = arith.constant 0 : i32
    %c0_i32_1 = arith.constant 0 : i32
    return %c0_i32, %c0_i32_0 : i32, i32
  }
  func.func @transform_2(%arg0: i32) -> (i32, i32) {
    %c0_i32 = arith.constant 0 : i32
    %c0_i32_0 = arith.constant 0 : i32
    %c0_i32_1 = arith.constant 0 : i32
    return %c0_i32, %c0_i32_0 : i32, i32
  }
  func.func @transform_3(%arg0: i32) -> (i32, i32) {
    %c0_i32 = arith.constant 0 : i32
    %c0_i32_0 = arith.constant 0 : i32
    %c0_i32_1 = arith.constant 0 : i32
    return %c0_i32, %c0_i32_0 : i32, i32
  }
  func.func @transform_4(%arg0: i32) -> (i32, i32) {
    %c0_i32 = arith.constant 0 : i32
    %c0_i32_0 = arith.constant 0 : i32
    %c0_i32_1 = arith.constant 0 : i32
    return %c0_i32, %c0_i32_0 : i32, i32
  }
  func.func @transform_5(%arg0: i32) -> (i32, i32) {
    %c0_i32 = arith.constant 0 : i32
    %c0_i32_0 = arith.constant 0 : i32
    return %arg0, %c0_i32 : i32, i32
  }
}

</mosaic_0001>

<llo_original>
// kernel: tpu_custom_call.1
$region0: #{tpu_custom_call.1}
  #allocation0 [shape = 'u32[]', space=smem, size = 0x4, offset = 0x4, fixed_abs, tag = 'smem constant byte address 0x4 - core index']
  #allocation1 [shape = 'u32[144,128]{1,0:T(1,128)}', space=vmem, size = 0x12000, scoped, tag = 'internal scratch']
  %s0 = inlined_call_operand.vmem [shape: bf16[48,20], index: 0, kind: input, shape index: {}]
  %s1 = inlined_call_operand.vmem [shape: bf16[20,128], index: 1, kind: input, shape index: {}]
  %s2 = inlined_call_operand.vmem [shape: f32[1,128], index: 2, kind: input, shape index: {}]
  %s3 = inlined_call_operand.vmem [shape: bf16[128,200], index: 3, kind: input, shape index: {}]
  %s4 = inlined_call_operand.vmem [shape: f32[1,200], index: 4, kind: input, shape index: {}]
  %s5 = inlined_call_operand.hbm [shape: f32[48,200], index: 5, kind: output, shape index: {}]
  %s6 = sld [smem:[#allocation0]]
  $region53: #{tpu_custom_call.1} parent=0
    _
  %s8 = ssub.s32 1, %s6
  %s9 = scalar_select 0, %s8, %s6
  $region1: #{tpu_custom_call.1} parent=0
    #allocation2 [shape = 'u8[49152]{0}', space=vmem, size = 0xc000, scoped, tag = 'output window, operand 0']
    #allocation3 [shape = 's32[2]{0}', space=sflag, size = 0x8, scoped, tag = 'scoped memory for tpu_custom_call.1']
    %10 = vsyncpa [#allocation3], 0
    %s11 = scalar_lea.sflag [#allocation3], 1
    %12 = vsyncpa %s11, 0
    loop: start=0, step=1, limit=4
    $region2: #{tpu_custom_call.1} parent=1 // loop_pre_header
      _
    $region3: #{tpu_custom_call.1} parent=1 // loop_header
      %s14 = sphi 0, %s18
      %p15 = scmp.ge.s32.totalorder %s14, 4
      %s24 = sphi 0, %s26
      %s27 = sphi 0, %s24
      %s28 = sphi 0, %s27
      %s44 = sphi 0, %s28
      %s48 = sphi 0, %s48
      %s50 = sphi 0, %s48
      %s51 = sphi 0, %s50
      %s65 = sphi 0, %s51
      %s69 = sphi 0, %s69
      %s71 = sphi 0, %s69
      %s72 = sphi 0, %s71
      %s86 = sphi 0, %s72
      %s90 = sphi 0, %s90
      %s92 = sphi 0, %s90
      %s93 = sphi 0, %s92
      %s107 = sphi 0, %s93
      %s111 = sphi 0, %s111
      %s113 = sphi 0, %s111
      %s114 = sphi 0, %s113
      %s128 = sphi 0, %s114
      %s134 = sphi 0, %s136
      %s137 = sphi 0, %s134
      %s138 = sphi 0, %s137
      %s154 = sphi 0, %s138
    $region4: #{tpu_custom_call.1} parent=1 // loop_header_branch
      %17 = sbr.rel (%p15) target = $region8
    $region5: #{tpu_custom_call.1} parent=1 // loop_body
      %s19 = ssub.s32 %s14, 1
      %s20 = ssub.s32 %s14, 2
      %s21 = sadd.s32 %s14, 1
      %s22 = ssub.s32 %s14, %s21
      %p23 = scmp.eq.s32.totalorder %s22, 0
      %s25 = sadd.s32 %s24, 1
      %s26 = scalar_select %p23, %s24, %s25
      %p29 = pneg %p23
      %p30 = scmp.eq.s32.totalorder %s14, 1
      %p31 = por %p29, %p30
      %p32 = scmp.ne.s32.totalorder %s24, %s27
      %p33 = scmp.eq.s32.totalorder %s14, 0
      %p34 = por %p32, %p33
      %p35 = scmp.ne.s32.totalorder %s24, %s27
      %p36 = scmp.eq.s32.totalorder %s19, 1
      %p37 = por %p35, %p36
      %p38 = scmp.ne.s32.totalorder %s27, %s28
      %p39 = scmp.eq.s32.totalorder %s19, 0
      %p40 = por %p38, %p39
      %p41 = scmp.ne.s32.totalorder %s27, %s28
      %p42 = scmp.eq.s32.totalorder %s20, 1
      %p43 = por %p41, %p42
      %p45 = scmp.ne.s32.totalorder %s28, %s44
      %p46 = scmp.eq.s32.totalorder %s20, 0
      %p47 = por %p45, %p46
      %s49 = sadd.s32 %s48, 1
      %p52 = scmp.eq.s32.totalorder %s14, 1
      %p53 = scmp.ne.s32.totalorder %s48, %s50
      %p54 = scmp.eq.s32.totalorder %s14, 0
      %p55 = por %p53, %p54
      %p56 = scmp.ne.s32.totalorder %s48, %s50
      %p57 = scmp.eq.s32.totalorder %s19, 1
      %p58 = por %p56, %p57
      %p59 = scmp.ne.s32.totalorder %s50, %s51
      %p60 = scmp.eq.s32.totalorder %s19, 0
      %p61 = por %p59, %p60
      %p62 = scmp.ne.s32.totalorder %s50, %s51
      %p63 = scmp.eq.s32.totalorder %s20, 1
      %p64 = por %p62, %p63
      %p66 = scmp.ne.s32.totalorder %s51, %s65
      %p67 = scmp.eq.s32.totalorder %s20, 0
      %p68 = por %p66, %p67
      %s70 = sadd.s32 %s69, 1
      %p73 = scmp.eq.s32.totalorder %s14, 1
      %p74 = scmp.ne.s32.totalorder %s69, %s71
      %p75 = scmp.eq.s32.totalorder %s14, 0
      %p76 = por %p74, %p75
      %p77 = scmp.ne.s32.totalorder %s69, %s71
      %p78 = scmp.eq.s32.totalorder %s19, 1
      %p79 = por %p77, %p78
      %p80 = scmp.ne.s32.totalorder %s71, %s72
      %p81 = scmp.eq.s32.totalorder %s19, 0
      %p82 = por %p80, %p81
      %p83 = scmp.ne.s32.totalorder %s71, %s72
      %p84 = scmp.eq.s32.totalorder %s20, 1
      %p85 = por %p83, %p84
      %p87 = scmp.ne.s32.totalorder %s72, %s86
      %p88 = scmp.eq.s32.totalorder %s20, 0
      %p89 = por %p87, %p88
      %s91 = sadd.s32 %s90, 1
      %p94 = scmp.eq.s32.totalorder %s14, 1
      %p95 = scmp.ne.s32.totalorder %s90, %s92
      %p96 = scmp.eq.s32.totalorder %s14, 0
      %p97 = por %p95, %p96
      %p98 = scmp.ne.s32.totalorder %s90, %s92
      %p99 = scmp.eq.s32.totalorder %s19, 1
      %p100 = por %p98, %p99
      %p101 = scmp.ne.s32.totalorder %s92, %s93
      %p102 = scmp.eq.s32.totalorder %s19, 0
      %p103 = por %p101, %p102
      %p104 = scmp.ne.s32.totalorder %s92, %s93
      %p105 = scmp.eq.s32.totalorder %s20, 1
      %p106 = por %p104, %p105
      %p108 = scmp.ne.s32.totalorder %s93, %s107
      %p109 = scmp.eq.s32.totalorder %s20, 0
      %p110 = por %p108, %p109
      %s112 = sadd.s32 %s111, 1
      %p115 = scmp.eq.s32.totalorder %s14, 1
      %p116 = scmp.ne.s32.totalorder %s111, %s113
      %p117 = scmp.eq.s32.totalorder %s14, 0
      %p118 = por %p116, %p117
      %p119 = scmp.ne.s32.totalorder %s111, %s113
      %p120 = scmp.eq.s32.totalorder %s19, 1
      %p121 = por %p119, %p120
      %p122 = scmp.ne.s32.totalorder %s113, %s114
      %p123 = scmp.eq.s32.totalorder %s19, 0
      %p124 = por %p122, %p123
      %p125 = scmp.ne.s32.totalorder %s113, %s114
      %p126 = scmp.eq.s32.totalorder %s20, 1
      %p127 = por %p125, %p126
      %p129 = scmp.ne.s32.totalorder %s114, %s128
      %p130 = scmp.eq.s32.totalorder %s20, 0
      %p131 = por %p129, %p130
      %s132 = ssub.s32 %s14, %s21
      %p133 = scmp.eq.s32.totalorder %s132, 0
      %s135 = sadd.s32 %s134, 1
      %s136 = scalar_select %p133, %s134, %s135
      %p139 = pneg %p133
      %p140 = scmp.eq.s32.totalorder %s14, 1
      %p141 = por %p139, %p140
      %p142 = scmp.ne.s32.totalorder %s134, %s137
      %p143 = scmp.eq.s32.totalorder %s14, 0
      %p144 = por %p142, %p143
      %p145 = scmp.ne.s32.totalorder %s134, %s137
      %p146 = scmp.eq.s32.totalorder %s19, 1
      %p147 = por %p145, %p146
      %p148 = scmp.ne.s32.totalorder %s137, %s138
      %p149 = scmp.eq.s32.totalorder %s19, 0
      %p150 = por %p148, %p149
      %p151 = scmp.ne.s32.totalorder %s137, %s138
      %p152 = scmp.eq.s32.totalorder %s20, 1
      %p153 = por %p151, %p152
      %p155 = scmp.ne.s32.totalorder %s138, %s154
      %p156 = scmp.eq.s32.totalorder %s20, 0
      %p157 = por %p155, %p156
      %p158 = scmp.le.s32.totalorder 1, %s14
      %p159 = scmp.lt.s32.totalorder %s14, 3
      %p160 = pnand %p158, %p159
      %p161 = pneg %p160
      // Predicated region
      $region9: #{tpu_custom_call.1} parent=5 // pred_check
        _
      $region10: #{tpu_custom_call.1} parent=5 // pred_check_branch
        %163 = sbr.rel (%p160) target = $region12
      $region11: #{tpu_custom_call.1} parent=5 // pred_region
        %s164 = ssub.s32 %s14, 1
        // Predicated region
        $region13: #{tpu_custom_call.1} parent=11 // pred_check
          %p165 = pneg %p61
        $region14: #{tpu_custom_call.1} parent=11 // pred_check_branch
          %167 = sbr.rel (%p165) target = $region16
        $region15: #{tpu_custom_call.1} parent=11 // pred_region
          _
        $region16: #{tpu_custom_call.1} parent=11 // pred_fallthru
          _
        // Predicated region
        $region17: #{tpu_custom_call.1} parent=11 // pred_check
          %p168 = pneg %p82
        $region18: #{tpu_custom_call.1} parent=11 // pred_check_branch
          %170 = sbr.rel (%p168) target = $region20
        $region19: #{tpu_custom_call.1} parent=11 // pred_region
          _
        $region20: #{tpu_custom_call.1} parent=11 // pred_fallthru
          _
        // Predicated region
        $region21: #{tpu_custom_call.1} parent=11 // pred_check
          %p171 = pneg %p103
        $region22: #{tpu_custom_call.1} parent=11 // pred_check_branch
          %173 = sbr.rel (%p171) target = $region24
        $region23: #{tpu_custom_call.1} parent=11 // pred_region
          _
        $region24: #{tpu_custom_call.1} parent=11 // pred_fallthru
          _
        // Predicated region
        $region25: #{tpu_custom_call.1} parent=11 // pred_check
          %p174 = pneg %p124
        $region26: #{tpu_custom_call.1} parent=11 // pred_check_branch
          %176 = sbr.rel (%p174) target = $region28
        $region27: #{tpu_custom_call.1} parent=11 // pred_region
          _
        $region28: #{tpu_custom_call.1} parent=11 // pred_fallthru
          _
      $region12: #{tpu_custom_call.1} parent=5 // pred_fallthru
        _
      %p177 = scmp.lt.s32.totalorder %s14, 2
      // Predicated region
      $region29: #{tpu_custom_call.1} parent=5 // pred_check
        %p178 = pneg %p177
      $region30: #{tpu_custom_call.1} parent=5 // pred_check_branch
        %180 = sbr.rel (%p178) target = $region32
      $region31: #{tpu_custom_call.1} parent=5 // pred_region
        // Predicated region
        $region33: #{tpu_custom_call.1} parent=31 // pred_check
          %p181 = pneg %p34
        $region34: #{tpu_custom_call.1} parent=31 // pred_check_branch
          %183 = sbr.rel (%p181) target = $region36
        $region35: #{tpu_custom_call.1} parent=31 // pred_region
          %s184 = smul.u32 3, %s14
          %p185 = scmp.lt.s32.totalorder %s184, 5
          %s186 = scalar_select %p185, %s184, 5
          %s187 = smul.addr %s186, 4
          %s188 = scalar_lea.vmem %s0, %s187
          %s189 = smul.u32 3, %s14
        $region36: #{tpu_custom_call.1} parent=31 // pred_fallthru
          _
      $region32: #{tpu_custom_call.1} parent=5 // pred_fallthru
        _
      %p190 = scmp.le.s32.totalorder 1, %s14
      %p191 = scmp.lt.s32.totalorder %s14, 3
      %p192 = pnand %p190, %p191
      %p193 = pneg %p192
      // Predicated region
      $region37: #{tpu_custom_call.1} parent=5 // pred_check
        _
      $region38: #{tpu_custom_call.1} parent=5 // pred_check_branch
        %195 = sbr.rel (%p192) target = $region40
      $region39: #{tpu_custom_call.1} parent=5 // pred_region
        %s196 = ssub.s32 %s14, 1
        %s197 = smul.u32 3, %s19
        %p198 = scmp.lt.s32.totalorder %s197, 5
        %s199 = scalar_select %p198, %s197, 5
        %s200 = smul.addr %s199, 4
        %s201 = scalar_lea.vmem %s0, %s200
        %p202 = pneg %p40
        %p203 = pneg %p37
        %p204 = pneg %p61
        %p205 = pneg %p58
        %p206 = pneg %p82
        %p207 = pneg %p79
        %p208 = pneg %p103
        %p209 = pneg %p100
        %p210 = pneg %p124
        %p211 = pneg %p121
        %p212 = pneg %p150
        %p213 = pneg %p147
        %s214 = sand.u32 %s137, 1
        %s215 = scalar_lea.sflag [#allocation3], %s214
        %s216 = sand.u32 %s137, 1
        %s217 = smul.addr %s216, 48
        %s218 = scalar_lea.vmem [#allocation2], %s217
        %s219 = smul.u32 3, %s19
        %p220 = scmp.lt.s32.totalorder %s219, 5
        %s221 = scalar_select %p220, %s219, 5
        %s222 = smul.addr %s221, 4
        %s223 = scalar_lea.vmem %s0, %s222
        %s224 = smul.u32 3, %s19
        %s225 = smul.u32 3, %s19
        %v227 = vld [vmem:[%s223] sm:$0xf]
        %v228 = vld [vmem:[%s223 + $0x4] sm:$0xf]
        %v229 = vld [vmem:[%s223 + $0x8] sm:$0xf]
        %v230 = vld [vmem:[%s1] sm:$0xf]
        %v231 = vld [vmem:[%s1 + $0x4] sm:$0xf]
        %v232 = vld [vmem:[%s1 + $0x8] sm:$0x3]
        %v233 = vld [vmem:[%s2] sm:$0x1]
        %v235 = vlaneseq
        %v236 = vshrl.u32 %v235, 7
        %v237 = vsub.s32 0, %v236
        %v238 = vrot.slane %v233, %v237
        %v243 = vunpack.c.l.b16 %v227
        %v244 = vunpack.c.l.b16 %v228
        %v245 = vunpack.c.l.b16 %v229
        %v246 = vpack.c.b16 %v244, %v243
        %v247 = vpack.c.b16 %v245, %v245
        %v251 = vunpack.c.l.b16 %v230
        %v252 = vunpack.c.l.b16 %v231
        %v253 = vunpack.c.l.b16 %v232
        %v254 = vpack.c.b16 %v252, %v251
        %v255 = vpack.c.b16 %v253, %v253
        %vm257 = vcmask 162816
        %v259 = vsel %vm257, %v246, 0
        %v262 = vsel %vm257, %v247, 0
        %vm264 = vcmask 1041408
        %v266 = vsel %vm264, %v255, 0
        %268 = vmatprep.subr.bf16.mxu0 0
        %269 = vmatpush1.bf16.msra.mxu0 %v254
        %270 = vmatprep.subr.bf16.mxu0 0
        %271 = vmatpush1.bf16.msra.mxu0 %v266
        %272 = vmatprep.subr.bf16.mxu0 0
        %273 = vmatpush1.bf16.msra.mxu0 0
        %274 = vmatprep.subr.bf16.mxu0 0
        %275 = vmatpush1.bf16.msra.mxu0 0
        %276 = vmatprep.subr.bf16.mxu0 0
        %277 = vmatpush1.bf16.msra.mxu0 0
        %278 = vmatprep.subr.bf16.mxu0 0
        %279 = vmatpush1.bf16.msra.mxu0 0
        %280 = vmatprep.subr.bf16.mxu0 0
        %281 = vmatpush1.bf16.msra.mxu0 0
        %282 = vmatprep.subr.bf16.mxu0 0
        %283 = vmatpush1.bf16.msra.mxu0 0
        %284 = vmatprep.subr.bf16.mxu0 0
        %285 = vmatpush1.bf16.msra.mxu0 0
        %286 = vmatprep.subr.bf16.mxu0 0
        %287 = vmatpush1.bf16.msra.mxu0 0
        %288 = vmatprep.subr.bf16.mxu0 0
        %289 = vmatpush1.bf16.msra.mxu0 0
        %290 = vmatprep.subr.bf16.mxu0 0
        %291 = vmatpush1.bf16.msra.mxu0 0
        %292 = vmatprep.subr.bf16.mxu0 0
        %293 = vmatpush1.bf16.msra.mxu0 0
        %294 = vmatprep.subr.bf16.mxu0 0
        %295 = vmatpush1.bf16.msra.mxu0 0
        %296 = vmatprep.subr.bf16.mxu0 0
        %297 = vmatpush1.bf16.msra.mxu0 0
        %298 = vmatprep.subr.bf16.mxu0 0
        %299 = vmatpush1.bf16.msra.mxu0 0
        %300 = vmatprep.mubr.bf16.mxu0 0
        %301 = vmatmul.mubr.bf16.gmra.mrb[0].mxu0 %v259
        %v302 = vpop.f32.mrb[0].mxu0
        %v303 = vadd.f32 %v238, %v302
        %v304 = vpop.f32.mrb[0].mxu0
        %v305 = vpop.f32.mrb[0].mxu0
        %v306 = vadd.f32 %v238, %v305
        %v307 = vpop.f32.mrb[0].mxu0
        %308 = vmatprep.mubr.bf16.mxu0 0
        %309 = vmatmul.mubr.bf16.gmra.mrb[0].mxu0 %v262
        %v310 = vpop.f32.mrb[0].mxu0
        %v311 = vadd.f32 %v238, %v310
        %v312 = vpop.f32.mrb[0].mxu0
        %v313 = vpop.f32.mrb[0].mxu0
        %v314 = vpop.f32.mrb[0].mxu0
        %315 = vdwg.mxu0
        %v316 = vmax.f32 %v303, 0.0
        %v317 = vmax.f32 %v306, 0.0
        %v318 = vmax.f32 %v311, 0.0
        %v319 = vpack.c.bf16 %v317, %v316
        %v320 = vpack.c.bf16 %v318, %v318
        %v321 = vld [vmem:[%s3] sm:$0xff]
        %v322 = vld [vmem:[%s3 + $0x8] sm:$0xff]
        %v323 = vld [vmem:[%s3 + $0x10] sm:$0xff]
        %v324 = vld [vmem:[%s3 + $0x18] sm:$0xff]
        %v325 = vld [vmem:[%s3 + $0x20] sm:$0xff]
        %v326 = vld [vmem:[%s3 + $0x28] sm:$0xff]
        %v327 = vld [vmem:[%s3 + $0x30] sm:$0xff]
        %v328 = vld [vmem:[%s3 + $0x38] sm:$0xff]
        %v329 = vld [vmem:[%s3 + $0x40] sm:$0xff]
        %v330 = vld [vmem:[%s3 + $0x48] sm:$0xff]
        %v331 = vld [vmem:[%s3 + $0x50] sm:$0xff]
        %v332 = vld [vmem:[%s3 + $0x58] sm:$0xff]
        %v333 = vld [vmem:[%s3 + $0x60] sm:$0xff]
        %v334 = vld [vmem:[%s3 + $0x68] sm:$0xff]
        %v335 = vld [vmem:[%s3 + $0x70] sm:$0xff]
        %v336 = vld [vmem:[%s3 + $0x78] sm:$0xff]
        %v337 = vld [vmem:[%s4] sm:$0x3]
        %v339 = vlaneseq
        %v340 = vshrl.u32 %v339, 7
        %v341 = vsub.s32 0, %v340
        %v342 = vrot.slane %v337, %v341
        %v343 = vlaneseq
        %v344 = vshrl.u32 %v343, 7
        %v345 = vsub.s32 1, %v344
        %v346 = vrot.slane %v337, %v345
        %v365 = vunpack.c.l.b16 %v321
        %v366 = vunpack.c.h.b16 %v321
        %v367 = vunpack.c.l.b16 %v322
        %v368 = vunpack.c.h.b16 %v322
        %v369 = vunpack.c.l.b16 %v323
        %v370 = vunpack.c.h.b16 %v323
        %v371 = vunpack.c.l.b16 %v324
        %v372 = vunpack.c.h.b16 %v324
        %v373 = vunpack.c.l.b16 %v325
        %v374 = vunpack.c.h.b16 %v325
        %v375 = vunpack.c.l.b16 %v326
        %v376 = vunpack.c.h.b16 %v326
        %v377 = vunpack.c.l.b16 %v327
        %v378 = vunpack.c.h.b16 %v327
        %v379 = vunpack.c.l.b16 %v328
        %v380 = vunpack.c.h.b16 %v328
        %v381 = vunpack.c.l.b16 %v329
        %v382 = vunpack.c.h.b16 %v329
        %v383 = vunpack.c.l.b16 %v330
        %v384 = vunpack.c.h.b16 %v330
        %v385 = vunpack.c.l.b16 %v331
        %v386 = vunpack.c.h.b16 %v331
        %v387 = vunpack.c.l.b16 %v332
        %v388 = vunpack.c.h.b16 %v332
        %v389 = vunpack.c.l.b16 %v333
        %v390 = vunpack.c.h.b16 %v333
        %v391 = vunpack.c.l.b16 %v334
        %v392 = vunpack.c.h.b16 %v334
        %v393 = vunpack.c.l.b16 %v335
        %v394 = vunpack.c.h.b16 %v335
        %v395 = vunpack.c.l.b16 %v336
        %v396 = vunpack.c.h.b16 %v336
        %v397 = vpack.c.b16 %v367, %v365
        %v398 = vpack.c.b16 %v368, %v366
        %v399 = vpack.c.b16 %v371, %v369
        %v400 = vpack.c.b16 %v372, %v370
        %v401 = vpack.c.b16 %v375, %v373
        %v402 = vpack.c.b16 %v376, %v374
        %v403 = vpack.c.b16 %v379, %v377
        %v404 = vpack.c.b16 %v380, %v378
        %v405 = vpack.c.b16 %v383, %v381
        %v406 = vpack.c.b16 %v384, %v382
        %v407 = vpack.c.b16 %v387, %v385
        %v408 = vpack.c.b16 %v388, %v386
        %v409 = vpack.c.b16 %v391, %v389
        %v410 = vpack.c.b16 %v392, %v390
        %v411 = vpack.c.b16 %v395, %v393
        %v412 = vpack.c.b16 %v396, %v394
        %429 = vmatprep.subr.bf16.mxu0 %v398
        %430 = vmatpush1.bf16.msra.mxu0 %v397
        %431 = vmatprep.subr.bf16.mxu0 %v400
        %432 = vmatpush1.bf16.msra.mxu0 %v399
        %433 = vmatprep.subr.bf16.mxu0 %v402
        %434 = vmatpush1.bf16.msra.mxu0 %v401
        %435 = vmatprep.subr.bf16.mxu0 %v404
        %436 = vmatpush1.bf16.msra.mxu0 %v403
        %437 = vmatprep.subr.bf16.mxu0 %v406
        %438 = vmatpush1.bf16.msra.mxu0 %v405
        %439 = vmatprep.subr.bf16.mxu0 %v408
        %440 = vmatpush1.bf16.msra.mxu0 %v407
        %441 = vmatprep.subr.bf16.mxu0 %v410
        %442 = vmatpush1.bf16.msra.mxu0 %v409
        %443 = vmatprep.subr.bf16.mxu0 %v412
        %444 = vmatpush1.bf16.msra.mxu0 %v411
        %445 = vmatprep.subr.bf16.mxu0 0
        %446 = vmatpush1.bf16.msra.mxu0 0
        %447 = vmatprep.subr.bf16.mxu0 0
        %448 = vmatpush1.bf16.msra.mxu0 0
        %449 = vmatprep.subr.bf16.mxu0 0
        %450 = vmatpush1.bf16.msra.mxu0 0
        %451 = vmatprep.subr.bf16.mxu0 0
        %452 = vmatpush1.bf16.msra.mxu0 0
        %453 = vmatprep.subr.bf16.mxu0 0
        %454 = vmatpush1.bf16.msra.mxu0 0
        %455 = vmatprep.subr.bf16.mxu0 0
        %456 = vmatpush1.bf16.msra.mxu0 0
        %457 = vmatprep.subr.bf16.mxu0 0
        %458 = vmatpush1.bf16.msra.mxu0 0
        %459 = vmatprep.subr.bf16.mxu0 0
        %460 = vmatpush1.bf16.msra.mxu0 0
        %461 = vmatprep.mubr.bf16.mxu0 0
        %462 = vmatmul.mubr.bf16.gmra.mrb[0].mxu0 %v319
        %v463 = vpop.f32.mrb[0].mxu0
        %v464 = vadd.f32 %v342, %v463
        %v465 = vpop.f32.mrb[0].mxu0
        %v466 = vadd.f32 %v346, %v465
        %v467 = vpop.f32.mrb[0].mxu0
        %v468 = vadd.f32 %v342, %v467
        %v469 = vpop.f32.mrb[0].mxu0
        %v470 = vadd.f32 %v346, %v469
        %471 = vmatprep.mubr.bf16.mxu0 0
        %472 = vmatmul.mubr.bf16.gmra.mrb[0].mxu0 %v320
        %v473 = vpop.f32.mrb[0].mxu0
        %v474 = vadd.f32 %v342, %v473
        %v475 = vpop.f32.mrb[0].mxu0
        %v476 = vadd.f32 %v346, %v475
        %v477 = vpop.f32.mrb[0].mxu0
        %v478 = vpop.f32.mrb[0].mxu0
        %479 = vdwg.mxu0
        %v480 = vsub.f32 0.0, %v464
        %v481 = vsub.f32 0.0, %v466
        %v482 = vsub.f32 0.0, %v468
        %v483 = vsub.f32 0.0, %v470
        %v484 = vsub.f32 0.0, %v474
        %v485 = vsub.f32 0.0, %v476
        %v486 = vmul.f32 %v480, 1.442695
        %v487 = vpow.pop %v486
        %v488 = vmul.f32 %v481, 1.442695
        %v489 = vpow.pop %v488
        %v490 = vmul.f32 %v482, 1.442695
        %v491 = vpow.pop %v490
        %v492 = vmul.f32 %v483, 1.442695
        %v493 = vpow.pop %v492
        %v494 = vmul.f32 %v484, 1.442695
        %v495 = vpow.pop %v494
        %v496 = vmul.f32 %v485, 1.442695
        %v497 = vpow.pop %v496
        %v498 = vadd.f32 %v487, 1.0
        %v499 = vadd.f32 %v489, 1.0
        %v500 = vadd.f32 %v491, 1.0
        %v501 = vadd.f32 %v493, 1.0
        %v502 = vadd.f32 %v495, 1.0
        %v503 = vadd.f32 %v497, 1.0
        %v504 = vrcp.pop %v498
        %v505 = vrcp.pop %v499
        %v506 = vrcp.pop %v500
        %v507 = vrcp.pop %v501
        %v508 = vrcp.pop %v502
        %v509 = vrcp.pop %v503
        %510 = vst [vmem:[%s218] sm:$0xff] %v504
        %vm511 = vcmask 588800
        %512 = vst.msk [vmem:[%s218 + $0x8] sm:$0xff] %vm511, %v505
        %513 = vst [vmem:[%s218 + $0x10] sm:$0xff] %v506
        %514 = vst.msk [vmem:[%s218 + $0x18] sm:$0xff] %vm511, %v507
        %515 = vst [vmem:[%s218 + $0x20] sm:$0xff] %v508
        %516 = vst.msk [vmem:[%s218 + $0x28] sm:$0xff] %vm511, %v509
        %s517 = sand.u32 %s137, 1
        %s518 = scalar_lea.sflag [#allocation3], %s517
        %s519 = sand.u32 %s137, 1
        %s520 = smul.addr %s519, 48
        %s521 = scalar_lea.vmem [#allocation2], %s520
        // Predicated region
        $region41: #{tpu_custom_call.1} parent=39 // pred_check
          %p522 = pneg %p147
        $region42: #{tpu_custom_call.1} parent=39 // pred_check_branch
          %524 = sbr.rel (%p522) target = $region44
        $region43: #{tpu_custom_call.1} parent=39 // pred_region
          %s525 = smul.u32 3, %s19
          %s527 = ssub.s32 768, 768
          %528 = vsyncadd %s518, %s527
          %s529 = smul.addr %s525, 2
          %s530 = smul.addr %s529, 128
          %s531 = scalar_lea.hbm %s5, %s530
          %s532 = sshll.u32 %s521, 4
          %s533 = int_to_ptr.vmem [resolvable:$true] %s532
          %538 = dma.vmem_to_hbm [thread:$0]  %s533, 768, %s531, %s518, 256, 256, 16
        $region44: #{tpu_custom_call.1} parent=39 // pred_fallthru
          _
      $region40: #{tpu_custom_call.1} parent=5 // pred_fallthru
        _
      %p539 = scmp.le.s32.totalorder 2, %s14
      // Predicated region
      $region45: #{tpu_custom_call.1} parent=5 // pred_check
        %p540 = pneg %p539
      $region46: #{tpu_custom_call.1} parent=5 // pred_check_branch
        %542 = sbr.rel (%p540) target = $region48
      $region47: #{tpu_custom_call.1} parent=5 // pred_region
        %s543 = ssub.s32 %s14, 2
        // Predicated region
        $region49: #{tpu_custom_call.1} parent=47 // pred_check
          %p544 = pneg %p153
        $region50: #{tpu_custom_call.1} parent=47 // pred_check_branch
          %546 = sbr.rel (%p544) target = $region52
        $region51: #{tpu_custom_call.1} parent=47 // pred_region
          %s547 = sand.u32 %s138, 1
          %s548 = scalar_lea.sflag [#allocation3], %s547
          %s549 = sand.u32 %s138, 1
          %s550 = smul.addr %s549, 48
          %s551 = scalar_lea.vmem [#allocation2], %s550
          %552 = dma.done %s548, 768
        $region52: #{tpu_custom_call.1} parent=47 // pred_fallthru
          _
      $region48: #{tpu_custom_call.1} parent=5 // pred_fallthru
        _
    $region6: #{tpu_custom_call.1} parent=1 // loop_footer
      %s18 = sadd.s32 1, %s14
    $region7: #{tpu_custom_call.1} parent=1 // loop_footer_branch
      %13 = sbr.rel target = $region3
    $region8: #{tpu_custom_call.1} parent=1 // loop_exit
      _
    %553 = vsyncpa [#allocation3], 1
    %s554 = scalar_lea.sflag [#allocation3], 1
    %555 = vsyncpa %s554, 1

</llo_original>
